<compile_context>
chip_gen: v7x
topology: tpu7x:2x2x1
jax: 0.10.0
libtpu: 0.0.40
codegen_flags: <defaults>
</compile_context>

<pallas_src>
import functools
import math

import jax
import jax.numpy as jnp
from jax.experimental import pallas as pl
from jax.experimental.pallas import tpu as pltpu


def _round_up(x, n):
    return ((x + n - 1) // n) * n


def _ffn_kernel(seed_ref, x_ref, w1_ref, b1_ref, w2_ref, b2_ref, o_ref,
                *scratch, dropout_rate, training, tm, te):
    # seed_ref: SMEM (1,) int32 scalar-prefetch (only read when training)
    # x_ref:  (tm, size)   w1_ref: (size, te)   b1_ref: (1, te)
    # w2_ref: (te, size)   b2_ref: (1, size)    o_ref:  (tm, size)
    # scratch: optional (tm, size) f32 accumulator (non-f32 outputs only).
    acc_ref = scratch[0] if scratch else o_ref   # f32 out -> accumulate in-place

    i = pl.program_id(0)
    e = pl.program_id(1)
    n_e = pl.num_programs(1)

    @pl.when(e == 0)
    def _init():
        acc_ref[...] = jnp.zeros_like(acc_ref)

    # linear1 tile on the MXU (f32 accumulate); bias + ReLU on the VPU.
    h = jnp.dot(x_ref[...], w1_ref[...], preferred_element_type=jnp.float32)
    h = jnp.maximum(h + b1_ref[...].astype(jnp.float32), 0.0)

    if training and dropout_rate > 0.0:
        # Counter-based hash PRNG keyed on global element index + seed.
        # Portable (TPU + interpret), tiling-invariant mask, mask-only here:
        # the 1/(1-p) scale is applied once at finalize.
        row = jax.lax.broadcasted_iota(jnp.int32, h.shape, 0) + i * tm
        col = jax.lax.broadcasted_iota(jnp.int32, h.shape, 1) + e * te
        seed = seed_ref[0].astype(jnp.uint32)
        bits = (row.astype(jnp.uint32) * jnp.uint32(0x9E3779B1)
                + col.astype(jnp.uint32) * jnp.uint32(0x85EBCA77)
                + seed * jnp.uint32(0xC2B2AE3D))
        bits ^= bits >> 16
        bits *= jnp.uint32(0x7FEB352D)
        bits ^= bits >> 15
        bits *= jnp.uint32(0x846CA68B)
        bits ^= bits >> 16
        # keep prob quantized to 1/2^32 (clamp is the degenerate p->0 limit).
        keep_thresh = jnp.uint32(
            min(int((1.0 - dropout_rate) * 4294967296.0), 4294967295))
        h = jnp.where(bits < keep_thresh, h, 0.0)

    # linear2 partial product, accumulated over expansion tiles.
    acc_ref[...] += jnp.dot(h.astype(w2_ref.dtype), w2_ref[...],
                            preferred_element_type=jnp.float32)

    @pl.when(e == n_e - 1)
    def _finalize():
        out = acc_ref[...].astype(jnp.float32)
        if training and dropout_rate > 0.0:
            out = out * (1.0 / (1.0 - dropout_rate))   # inverted-dropout scale
        out = out + b2_ref[...].astype(jnp.float32)
        o_ref[...] = out.astype(o_ref.dtype)


def _select_tiles(m, size, expansion, itemsize, use_acc_scratch, budget_bytes):
    """VMEM-aware (tm, te) selection against a per-generation budget."""
    limit = int(budget_bytes * 0.75)   # headroom for Mosaic internal scratch

    def footprint(tm, te):
        db = 2  # double-buffered pipeline slots
        fb = 0
        fb += db * tm * size * itemsize               # x tile
        fb += db * size * te * itemsize               # w1 tile
        fb += db * te * size * itemsize               # w2 tile
        fb += db * 8 * max(te, 128) * itemsize        # b1 (padded to (8,128))
        fb += db * 8 * max(size, 128) * itemsize      # b2 (padded)
        fb += db * tm * size * itemsize               # out tile
        if use_acc_scratch:
            fb += tm * size * 4                       # f32 accumulator
        fb += 2 * tm * te * 4                         # f32 h temp + cast copy
        return fb

    # tm candidates: guarantee >= 2 M tiles when m > 8 so "parallel" on M can
    # use both v7x TensorCores (harmless extra grid step on v5e/v6e).
    if m <= 8:
        tm_opts = [m]
    else:
        tm_cap = min(_round_up(m, 8), _round_up(pl.cdiv(m, 2), 8))
        tm_opts = sorted(
            {tm_cap} | {v for v in (1024, 512, 256, 128, 64, 32, 16, 8)
                        if v < tm_cap},
            reverse=True)

    # te candidates: weight residency first (te == expansion => grid-constant
    # weight BlockSpecs, DMA'd once per call), then 128-multiple exact
    # divisors of expansion (largest first).
    te_opts = [expansion]
    t = (expansion // 128) * 128
    while t >= 128:
        if t < expansion and expansion % t == 0:
            te_opts.append(t)
        t -= 128

    for te in te_opts:
        for tm in tm_opts:
            if footprint(tm, te) <= limit:
                return tm, te
    raise ValueError(
        f"FFN tiles do not fit the VMEM budget ({budget_bytes} bytes) for "
        f"size={size}, expansion={expansion}; raise budget_bytes / "
        "vmem_limit_bytes or use a 128-divisible expansion.")


@functools.partial(
    jax.jit,
    static_argnames=("dropout_rate", "training", "budget_bytes",
                     "vmem_limit_bytes"))
def feed_forward(x, w1, b1, w2, b2, *, dropout_rate=0.0, training=False,
                 seed=0, budget_bytes=48 * 1024 * 1024,
                 vmem_limit_bytes=None):
    """y = relu(x @ w1 + b1) [dropout] @ w2 + b2   (torch FeedForwardComponent).

    x:  [..., size]
    w1: [size, expansion]  (= torch linear1.weight.T, transposed once at load)
    b1: [expansion]
    w2: [expansion, size]  (= torch linear2.weight.T, transposed once at load)
    b2: [size]
    For v6e/v7x peak MXU throughput pass bf16 x / weights (accumulation stays
    in f32 inside the kernel).
    """
    *lead, size = x.shape
    expansion = w1.shape[1]
    assert w1.shape == (size, expansion), w1.shape
    assert w2.shape == (expansion, size), w2.shape
    assert b1.shape == (expansion,), b1.shape
    assert b2.shape == (size,), b2.shape

    m = 1
    for d in lead:
        m *= d
    m = max(m, 1)
    x2d = x.reshape(m, size)
    b1_2d = b1.reshape(1, expansion)
    b2_2d = b2.reshape(1, size)
    seed_arr = jnp.asarray(seed, dtype=jnp.int32).reshape(1)

    out_dtype = x.dtype
    use_acc_scratch = out_dtype != jnp.float32   # f32 out accumulates in o_ref
    itemsize = x2d.dtype.itemsize
    tm, te = _select_tiles(m, size, expansion, itemsize,
                           use_acc_scratch, budget_bytes)
    grid = (pl.cdiv(m, tm), pl.cdiv(expansion, te))

    kernel = functools.partial(_ffn_kernel,
                               dropout_rate=float(dropout_rate),
                               training=bool(training),
                               tm=tm, te=te)

    cost = pl.CostEstimate(
        flops=4 * m * size * expansion,          # two matmuls
        transcendentals=0,
        bytes_accessed=(x2d.size + w1.size + w2.size + b1.size + b2.size
                        + m * size) * itemsize)

    scratch_shapes = ([pltpu.VMEM((tm, size), jnp.float32)]
                      if use_acc_scratch else [])
    limit = int(vmem_limit_bytes if vmem_limit_bytes is not None
                else budget_bytes)

    out2d = pl.pallas_call(
        kernel,
        out_shape=jax.ShapeDtypeStruct((m, size), out_dtype),
        grid_spec=pltpu.PrefetchScalarGridSpec(
            num_scalar_prefetch=1,               # seed lands in SMEM
            grid=grid,
            in_specs=[
                pl.BlockSpec((tm, size), lambda i, e, s: (i, 0)),   # x
                pl.BlockSpec((size, te), lambda i, e, s: (0, e)),   # w1
                pl.BlockSpec((1, te),    lambda i, e, s: (0, e)),   # b1
                pl.BlockSpec((te, size), lambda i, e, s: (e, 0)),   # w2
                pl.BlockSpec((1, size),  lambda i, e, s: (0, 0)),   # b2
            ],
            out_specs=pl.BlockSpec((tm, size), lambda i, e, s: (i, 0)),
            scratch_shapes=scratch_shapes,
        ),
        compiler_params=pltpu.CompilerParams(
            dimension_semantics=("parallel", "arbitrary"),
            vmem_limit_bytes=limit),
        cost_estimate=cost,
    )(seed_arr, x2d, w1, b1_2d, w2, b2_2d)

    return out2d.reshape(*lead, size)


def init_ffn_params(key, size, expansion, dtype=jnp.float32):
    """Matches nn.Linear defaults (uniform +-1/sqrt(fan_in)); weights stored
    already transposed to (in, out) so the hot path never transposes."""
    k1w, k1b, k2w, k2b = jax.random.split(key, 4)
    bound1 = 1.0 / math.sqrt(size)
    bound2 = 1.0 / math.sqrt(expansion)
    w1 = jax.random.uniform(k1w, (size, expansion), dtype, -bound1, bound1)
    b1 = jax.random.uniform(k1b, (expansion,), dtype, -bound1, bound1)
    w2 = jax.random.uniform(k2w, (expansion, size), dtype, -bound2, bound2)
    b2 = jax.random.uniform(k2b, (size,), dtype, -bound2, bound2)
    return w1, b1, w2, b2


if __name__ == "__main__":
    # Small shapes implied by the module: size=32, expansion=128 (4x),
    # dropout=0.1, x: [batch=2, seq=8, size=32] -> output [2, 8, 32].
    batch, seq, size, expansion, dropout = 2, 8, 32, 128, 0.1

    key = jax.random.PRNGKey(0)
    kx, kp = jax.random.split(key)
    x = jax.random.normal(kx, (batch, seq, size), jnp.float32)
    w1, b1, w2, b2 = init_ffn_params(kp, size, expansion)

    # 1) Eval-mode forward (dropout is identity, like module.eval()).
    y = feed_forward(x, w1, b1, w2, b2, dropout_rate=dropout, training=False)
    jax.block_until_ready(y)
    y_ref = jnp.maximum(x @ w1 + b1, 0.0) @ w2 + b2
    assert y.shape == (batch, seq, size)
    assert jnp.allclose(y, y_ref, atol=1e-5, rtol=1e-5)

    # 2) bf16 operands (exercises the separate f32-scratch accumulator path).
    to_bf16 = lambda a: a.astype(jnp.bfloat16)
    yb = feed_forward(to_bf16(x), to_bf16(w1), to_bf16(b1), to_bf16(w2),
                      to_bf16(b2), dropout_rate=dropout, training=False)
    jax.block_until_ready(yb)
    assert yb.shape == (batch, seq, size)
    assert jnp.allclose(yb.astype(jnp.float32), y_ref, atol=0.2, rtol=0.1)

    # 3) Training-mode smoke test (stochastic dropout -> sanity checks only).
    y_tr = feed_forward(x, w1, b1, w2, b2, dropout_rate=dropout,
                        training=True, seed=123)
    jax.block_until_ready(y_tr)
    assert y_tr.shape == (batch, seq, size)
    assert bool(jnp.all(jnp.isfinite(y_tr)))

    print("KERNEL_OK")
</pallas_src>

<mosaic_0001>
module attributes {stable_mosaic.version = 11 : i64} {
  func.func @_ffn_kernel(%arg0: i32, %arg1: i32, %arg2: memref<1xi32, #tpu.memory_space<smem>>, %arg3: memref<8x32xf32, #tpu.memory_space<vmem>>, %arg4: memref<32x128xf32, #tpu.memory_space<vmem>>, %arg5: memref<1x128xf32, #tpu.memory_space<vmem>>, %arg6: memref<128x32xf32, #tpu.memory_space<vmem>>, %arg7: memref<1x32xf32, #tpu.memory_space<vmem>>, %arg8: memref<8x32xf32, #tpu.memory_space<vmem>>) attributes {dimension_semantics = [#tpu.dimension_semantics<parallel>, #tpu.dimension_semantics<arbitrary>], iteration_bounds = array<i64: 2, 1>, scalar_prefetch = 1 : i64, scratch_operands = 0 : i64, tpu.core_type = #tpu.core_type<tc>, window_params = [{transform_indices = @transform_0, window_bounds = array<i64: 8, 32>}, {transform_indices = @transform_1, window_bounds = array<i64: 32, 128>}, {transform_indices = @transform_2, window_bounds = array<i64: 1, 128>}, {transform_indices = @transform_3, window_bounds = array<i64: 128, 32>}, {pipeline_mode = #tpu.pipeline_mode<synchronous>, transform_indices = @transform_4, window_bounds = array<i64: 1, 32>}, {transform_indices = @transform_5, window_bounds = array<i64: 8, 32>}]} {
    %c0_i32 = arith.constant 0 : i32
    %0 = arith.cmpi eq, %arg1, %c0_i32 : i32
    %1 = arith.extui %0 : i1 to i32
    %c0_i32_0 = arith.constant 0 : i32
    %2 = arith.cmpi ne, %1, %c0_i32_0 : i32
    scf.if %2 {
      %cst_16 = arith.constant 0.000000e+00 : f32
      %19 = vector.broadcast %cst_16 : f32 to vector<8x32xf32>
      %c0_17 = arith.constant 0 : index
      %c0_18 = arith.constant 0 : index
      %20 = vector.load %arg8[%c0_17, %c0_18] : memref<8x32xf32, #tpu.memory_space<vmem>>, vector<8x32xf32>
      tpu.vector_store %arg8[%c0_17, %c0_18], %19 {strides = array<i32>} : memref<8x32xf32, #tpu.memory_space<vmem>>, vector<8x32xf32>,
    } else {
    }
    %c0 = arith.constant 0 : index
    %c0_1 = arith.constant 0 : index
    %3 = vector.load %arg3[%c0, %c0_1] : memref<8x32xf32, #tpu.memory_space<vmem>>, vector<8x32xf32>
    %c0_2 = arith.constant 0 : index
    %c0_3 = arith.constant 0 : index
    %4 = vector.load %arg4[%c0_2, %c0_3] : memref<32x128xf32, #tpu.memory_space<vmem>>, vector<32x128xf32>
    %cst = arith.constant dense<0.000000e+00> : vector<8x128xf32>
    %5 = tpu.matmul %3, %4, %cst {dimension_numbers = #tpu.dot_dimension_numbers<[1], [0], [0], [1], [0, 0, 1, 1], [], []>} : vector<8x32xf32>, vector<32x128xf32>, vector<8x128xf32> -> vector<8x128xf32>
    %c0_4 = arith.constant 0 : index
    %c0_5 = arith.constant 0 : index
    %6 = vector.load %arg5[%c0_4, %c0_5] : memref<1x128xf32, #tpu.memory_space<vmem>>, vector<1x128xf32>
    %7 = vector.broadcast %6 : vector<1x128xf32> to vector<8x128xf32>
    %8 = arith.addf %5, %7 : vector<8x128xf32>
    %cst_6 = arith.constant 0.000000e+00 : f32
    %9 = vector.broadcast %cst_6 : f32 to vector<8x128xf32>
    %10 = arith.maximumf %8, %9 : vector<8x128xf32>
    %c0_7 = arith.constant 0 : index
    %c0_8 = arith.constant 0 : index
    %11 = vector.load %arg8[%c0_7, %c0_8] : memref<8x32xf32, #tpu.memory_space<vmem>>, vector<8x32xf32>
    %c0_9 = arith.constant 0 : index
    %c0_10 = arith.constant 0 : index
    %12 = vector.load %arg6[%c0_9, %c0_10] : memref<128x32xf32, #tpu.memory_space<vmem>>, vector<128x32xf32>
    %cst_11 = arith.constant dense<0.000000e+00> : vector<8x32xf32>
    %13 = tpu.matmul %10, %12, %cst_11 {dimension_numbers = #tpu.dot_dimension_numbers<[1], [0], [0], [1], [0, 0, 1, 1], [], []>} : vector<8x128xf32>, vector<128x32xf32>, vector<8x32xf32> -> vector<8x32xf32>
    %14 = arith.addf %11, %13 : vector<8x32xf32>
    %c0_12 = arith.constant 0 : index
    %c0_13 = arith.constant 0 : index
    %15 = vector.load %arg8[%c0_12, %c0_13] : memref<8x32xf32, #tpu.memory_space<vmem>>, vector<8x32xf32>
    tpu.vector_store %arg8[%c0_12, %c0_13], %14 {strides = array<i32>} : memref<8x32xf32, #tpu.memory_space<vmem>>, vector<8x32xf32>,
    %c0_i32_14 = arith.constant 0 : i32
    %16 = arith.cmpi eq, %arg1, %c0_i32_14 : i32
    %17 = arith.extui %16 : i1 to i32
    %c0_i32_15 = arith.constant 0 : i32
    %18 = arith.cmpi ne, %17, %c0_i32_15 : i32
    scf.if %18 {
      %c0_16 = arith.constant 0 : index
      %c0_17 = arith.constant 0 : index
      %19 = vector.load %arg8[%c0_16, %c0_17] : memref<8x32xf32, #tpu.memory_space<vmem>>, vector<8x32xf32>
      %c0_18 = arith.constant 0 : index
      %c0_19 = arith.constant 0 : index
      %20 = vector.load %arg7[%c0_18, %c0_19] : memref<1x32xf32, #tpu.memory_space<vmem>>, vector<1x32xf32>
      %21 = vector.broadcast %20 : vector<1x32xf32> to vector<8x32xf32>
      %22 = arith.addf %19, %21 : vector<8x32xf32>
      %c0_20 = arith.constant 0 : index
      %c0_21 = arith.constant 0 : index
      %23 = vector.load %arg8[%c0_20, %c0_21] : memref<8x32xf32, #tpu.memory_space<vmem>>, vector<8x32xf32>
      tpu.vector_store %arg8[%c0_20, %c0_21], %22 {strides = array<i32>} : memref<8x32xf32, #tpu.memory_space<vmem>>, vector<8x32xf32>,
    } else {
    }
    return
  }
  func.func @transform_0(%arg0: i32, %arg1: i32, %arg2: memref<1xi32, #tpu.memory_space<smem>>) -> (i32, i32) {
    %c0_i32 = arith.constant 0 : i32
    %c0_i32_0 = arith.constant 0 : i32
    return %arg0, %c0_i32 : i32, i32
  }
  func.func @transform_1(%arg0: i32, %arg1: i32, %arg2: memref<1xi32, #tpu.memory_space<smem>>) -> (i32, i32) {
    %c0_i32 = arith.constant 0 : i32
    %c0_i32_0 = arith.constant 0 : i32
    return %c0_i32, %arg1 : i32, i32
  }
  func.func @transform_2(%arg0: i32, %arg1: i32, %arg2: memref<1xi32, #tpu.memory_space<smem>>) -> (i32, i32) {
    %c0_i32 = arith.constant 0 : i32
    %c0_i32_0 = arith.constant 0 : i32
    return %c0_i32, %arg1 : i32, i32
  }
  func.func @transform_3(%arg0: i32, %arg1: i32, %arg2: memref<1xi32, #tpu.memory_space<smem>>) -> (i32, i32) {
    %c0_i32 = arith.constant 0 : i32
    %c0_i32_0 = arith.constant 0 : i32
    return %arg1, %c0_i32 : i32, i32
  }
  func.func @transform_4(%arg0: i32, %arg1: i32, %arg2: memref<1xi32, #tpu.memory_space<smem>>) -> (i32, i32) {
    %c0_i32 = arith.constant 0 : i32
    %c0_i32_0 = arith.constant 0 : i32
    %c0_i32_1 = arith.constant 0 : i32
    return %c0_i32, %c0_i32_0 : i32, i32
  }
  func.func @transform_5(%arg0: i32, %arg1: i32, %arg2: memref<1xi32, #tpu.memory_space<smem>>) -> (i32, i32) {
    %c0_i32 = arith.constant 0 : i32
    %c0_i32_0 = arith.constant 0 : i32
    return %arg0, %c0_i32 : i32, i32
  }
}

</mosaic_0001>

<llo_original>
// kernel: feed_forward.1
$region0: #{feed_forward.1}
  #allocation0 [shape = 'u32[]', space=smem, size = 0x4, offset = 0x4, fixed_abs, tag = 'smem constant byte address 0x4 - core index']
  #allocation1 [shape = 'u32[144,128]{1,0:T(1,128)}', space=vmem, size = 0x12000, scoped, tag = 'internal scratch']
  #allocation2 [shape = 's32[1]{0}', space=sflag, size = 0x4, scoped, tag = 'scoped memory for feed_forward.1']
  #allocation3 [shape = 's32[1]{0:T(128)S(6)}', space=smem, size = 0x200, scoped, tag = 'prefetched SMEM operand 0']
  %s0 = inlined_call_operand.<no memory space> [shape: s32[1], index: 0, kind: input, shape index: {}]
  %s1 = inlined_call_operand.vmem [shape: f32[16,32], index: 1, kind: input, shape index: {}]
  %s2 = inlined_call_operand.vmem [shape: f32[32,128], index: 2, kind: input, shape index: {}]
  %s3 = inlined_call_operand.vmem [shape: f32[1,128], index: 3, kind: input, shape index: {}]
  %s4 = inlined_call_operand.vmem [shape: f32[128,32], index: 4, kind: input, shape index: {}]
  %s5 = inlined_call_operand.vmem [shape: f32[1,32], index: 5, kind: input, shape index: {}]
  %s6 = inlined_call_operand.hbm [shape: f32[16,32], index: 6, kind: output, shape index: {}]
  %s7 = sld [smem:[#allocation0]]
  $region61: #{feed_forward.1} parent=0
    _
  %s9 = ssub.s32 1, %s7
  %s10 = scalar_select 0, %s9, %s7
  %11 = sst [smem:[#allocation3]] %s0
  $region1: #{feed_forward.1} parent=0
    #allocation4 [shape = 'u8[8192]{0}', space=vmem, size = 0x2000, scoped, tag = 'output window, operand 0']
    #allocation5 [shape = 's32[2]{0}', space=sflag, size = 0x8, scoped, tag = 'scoped memory for feed_forward.1']
    %12 = vsyncpa [#allocation5], 0
    %s13 = scalar_lea.sflag [#allocation5], 1
    %14 = vsyncpa %s13, 0
    loop: start=0, step=1, limit=4
    $region2: #{feed_forward.1} parent=1 // loop_pre_header
      _
    $region3: #{feed_forward.1} parent=1 // loop_header
      %s16 = sphi 0, %s20
      %p17 = scmp.ge.s32.totalorder %s16, 4
      %s23 = sphi 0, %s35
      %s24 = sphi 0, %s31
      %s25 = sphi 0, %s23
      %s26 = sphi 0, %s24
      %s27 = sphi 0, %s25
      %s28 = sphi 0, %s26
      %s38 = sphi 0, %s40
      %s41 = sphi 0, %s38
      %s42 = sphi 0, %s41
      %s58 = sphi 0, %s42
      %s64 = sphi 0, %s66
      %s67 = sphi 0, %s64
      %s68 = sphi 0, %s67
      %s84 = sphi 0, %s68
      %s90 = sphi 0, %s92
      %s93 = sphi 0, %s90
      %s94 = sphi 0, %s93
      %s110 = sphi 0, %s94
      %s116 = sphi 0, %s118
      %s119 = sphi 0, %s116
      %s120 = sphi 0, %s119
      %s136 = sphi 0, %s120
      %s140 = sphi 0, %s140
      %s142 = sphi 0, %s140
      %s143 = sphi 0, %s142
      %s157 = sphi 0, %s143
      %s163 = sphi 0, %s165
      %s166 = sphi 0, %s163
      %s167 = sphi 0, %s166
      %s183 = sphi 0, %s167
    $region4: #{feed_forward.1} parent=1 // loop_header_branch
      %19 = sbr.rel (%p17) target = $region8
    $region5: #{feed_forward.1} parent=1 // loop_body
      %s21 = ssub.s32 %s16, 1
      %s22 = ssub.s32 %s16, 2
      %s29 = sadd.s32 1, %s24
      %p30 = scmp.ge.s32.totalorder %s29, 1
      %s31 = scalar_select %p30, 0, %s29
      %s32 = sadd.s32 1, %s23
      %s33 = scalar_select %p30, %s32, %s23
      %p34 = scmp.ge.s32.totalorder %s33, 2
      %s35 = scalar_select %p34, 0, %s33
      %s36 = ssub.s32 %s23, %s35
      %p37 = scmp.eq.s32.totalorder %s36, 0
      %s39 = sadd.s32 %s38, 1
      %s40 = scalar_select %p37, %s38, %s39
      %p43 = pneg %p37
      %p44 = scmp.eq.s32.totalorder %s16, 1
      %p45 = por %p43, %p44
      %p46 = scmp.ne.s32.totalorder %s38, %s41
      %p47 = scmp.eq.s32.totalorder %s16, 0
      %p48 = por %p46, %p47
      %p49 = scmp.ne.s32.totalorder %s38, %s41
      %p50 = scmp.eq.s32.totalorder %s21, 1
      %p51 = por %p49, %p50
      %p52 = scmp.ne.s32.totalorder %s41, %s42
      %p53 = scmp.eq.s32.totalorder %s21, 0
      %p54 = por %p52, %p53
      %p55 = scmp.ne.s32.totalorder %s41, %s42
      %p56 = scmp.eq.s32.totalorder %s22, 1
      %p57 = por %p55, %p56
      %p59 = scmp.ne.s32.totalorder %s42, %s58
      %p60 = scmp.eq.s32.totalorder %s22, 0
      %p61 = por %p59, %p60
      %s62 = ssub.s32 %s24, %s31
      %p63 = scmp.eq.s32.totalorder %s62, 0
      %s65 = sadd.s32 %s64, 1
      %s66 = scalar_select %p63, %s64, %s65
      %p69 = pneg %p63
      %p70 = scmp.eq.s32.totalorder %s16, 1
      %p71 = por %p69, %p70
      %p72 = scmp.ne.s32.totalorder %s64, %s67
      %p73 = scmp.eq.s32.totalorder %s16, 0
      %p74 = por %p72, %p73
      %p75 = scmp.ne.s32.totalorder %s64, %s67
      %p76 = scmp.eq.s32.totalorder %s21, 1
      %p77 = por %p75, %p76
      %p78 = scmp.ne.s32.totalorder %s67, %s68
      %p79 = scmp.eq.s32.totalorder %s21, 0
      %p80 = por %p78, %p79
      %p81 = scmp.ne.s32.totalorder %s67, %s68
      %p82 = scmp.eq.s32.totalorder %s22, 1
      %p83 = por %p81, %p82
      %p85 = scmp.ne.s32.totalorder %s68, %s84
      %p86 = scmp.eq.s32.totalorder %s22, 0
      %p87 = por %p85, %p86
      %s88 = ssub.s32 %s24, %s31
      %p89 = scmp.eq.s32.totalorder %s88, 0
      %s91 = sadd.s32 %s90, 1
      %s92 = scalar_select %p89, %s90, %s91
      %p95 = pneg %p89
      %p96 = scmp.eq.s32.totalorder %s16, 1
      %p97 = por %p95, %p96
      %p98 = scmp.ne.s32.totalorder %s90, %s93
      %p99 = scmp.eq.s32.totalorder %s16, 0
      %p100 = por %p98, %p99
      %p101 = scmp.ne.s32.totalorder %s90, %s93
      %p102 = scmp.eq.s32.totalorder %s21, 1
      %p103 = por %p101, %p102
      %p104 = scmp.ne.s32.totalorder %s93, %s94
      %p105 = scmp.eq.s32.totalorder %s21, 0
      %p106 = por %p104, %p105
      %p107 = scmp.ne.s32.totalorder %s93, %s94
      %p108 = scmp.eq.s32.totalorder %s22, 1
      %p109 = por %p107, %p108
      %p111 = scmp.ne.s32.totalorder %s94, %s110
      %p112 = scmp.eq.s32.totalorder %s22, 0
      %p113 = por %p111, %p112
      %s114 = ssub.s32 %s24, %s31
      %p115 = scmp.eq.s32.totalorder %s114, 0
      %s117 = sadd.s32 %s116, 1
      %s118 = scalar_select %p115, %s116, %s117
      %p121 = pneg %p115
      %p122 = scmp.eq.s32.totalorder %s16, 1
      %p123 = por %p121, %p122
      %p124 = scmp.ne.s32.totalorder %s116, %s119
      %p125 = scmp.eq.s32.totalorder %s16, 0
      %p126 = por %p124, %p125
      %p127 = scmp.ne.s32.totalorder %s116, %s119
      %p128 = scmp.eq.s32.totalorder %s21, 1
      %p129 = por %p127, %p128
      %p130 = scmp.ne.s32.totalorder %s119, %s120
      %p131 = scmp.eq.s32.totalorder %s21, 0
      %p132 = por %p130, %p131
      %p133 = scmp.ne.s32.totalorder %s119, %s120
      %p134 = scmp.eq.s32.totalorder %s22, 1
      %p135 = por %p133, %p134
      %p137 = scmp.ne.s32.totalorder %s120, %s136
      %p138 = scmp.eq.s32.totalorder %s22, 0
      %p139 = por %p137, %p138
      %s141 = sadd.s32 %s140, 1
      %p144 = scmp.eq.s32.totalorder %s16, 1
      %p145 = scmp.ne.s32.totalorder %s140, %s142
      %p146 = scmp.eq.s32.totalorder %s16, 0
      %p147 = por %p145, %p146
      %p148 = scmp.ne.s32.totalorder %s140, %s142
      %p149 = scmp.eq.s32.totalorder %s21, 1
      %p150 = por %p148, %p149
      %p151 = scmp.ne.s32.totalorder %s142, %s143
      %p152 = scmp.eq.s32.totalorder %s21, 0
      %p153 = por %p151, %p152
      %p154 = scmp.ne.s32.totalorder %s142, %s143
      %p155 = scmp.eq.s32.totalorder %s22, 1
      %p156 = por %p154, %p155
      %p158 = scmp.ne.s32.totalorder %s143, %s157
      %p159 = scmp.eq.s32.totalorder %s22, 0
      %p160 = por %p158, %p159
      %s161 = ssub.s32 %s23, %s35
      %p162 = scmp.eq.s32.totalorder %s161, 0
      %s164 = sadd.s32 %s163, 1
      %s165 = scalar_select %p162, %s163, %s164
      %p168 = pneg %p162
      %p169 = scmp.eq.s32.totalorder %s16, 1
      %p170 = por %p168, %p169
      %p171 = scmp.ne.s32.totalorder %s163, %s166
      %p172 = scmp.eq.s32.totalorder %s16, 0
      %p173 = por %p171, %p172
      %p174 = scmp.ne.s32.totalorder %s163, %s166
      %p175 = scmp.eq.s32.totalorder %s21, 1
      %p176 = por %p174, %p175
      %p177 = scmp.ne.s32.totalorder %s166, %s167
      %p178 = scmp.eq.s32.totalorder %s21, 0
      %p179 = por %p177, %p178
      %p180 = scmp.ne.s32.totalorder %s166, %s167
      %p181 = scmp.eq.s32.totalorder %s22, 1
      %p182 = por %p180, %p181
      %p184 = scmp.ne.s32.totalorder %s167, %s183
      %p185 = scmp.eq.s32.totalorder %s22, 0
      %p186 = por %p184, %p185
      %p187 = scmp.le.s32.totalorder 1, %s16
      %p188 = scmp.lt.s32.totalorder %s16, 3
      %p189 = pnand %p187, %p188
      %p190 = pneg %p189
      // Predicated region
      $region9: #{feed_forward.1} parent=5 // pred_check
        _
      $region10: #{feed_forward.1} parent=5 // pred_check_branch
        %192 = sbr.rel (%p189) target = $region12
      $region11: #{feed_forward.1} parent=5 // pred_region
        %s193 = ssub.s32 %s16, 1
        // Predicated region
        $region13: #{feed_forward.1} parent=11 // pred_check
          %p194 = pneg %p80
        $region14: #{feed_forward.1} parent=11 // pred_check_branch
          %196 = sbr.rel (%p194) target = $region16
        $region15: #{feed_forward.1} parent=11 // pred_region
          %p197 = scmp.lt.s32.totalorder %s26, 0
          %s198 = scalar_select %p197, %s26, 0
          %s199 = smul.addr %s198, 8
          %s200 = scalar_lea.vmem %s2, %s199
        $region16: #{feed_forward.1} parent=11 // pred_fallthru
          _
        // Predicated region
        $region17: #{feed_forward.1} parent=11 // pred_check
          %p201 = pneg %p106
        $region18: #{feed_forward.1} parent=11 // pred_check_branch
          %203 = sbr.rel (%p201) target = $region20
        $region19: #{feed_forward.1} parent=11 // pred_region
          %p204 = scmp.lt.s32.totalorder %s26, 0
          %s205 = scalar_select %p204, %s26, 0
          %s206 = scalar_lea.vmem %s3, %s205
        $region20: #{feed_forward.1} parent=11 // pred_fallthru
          _
        // Predicated region
        $region21: #{feed_forward.1} parent=11 // pred_check
          %p207 = pneg %p132
        $region22: #{feed_forward.1} parent=11 // pred_check_branch
          %209 = sbr.rel (%p207) target = $region24
        $region23: #{feed_forward.1} parent=11 // pred_region
          %s210 = smul.u32 16, %s26
          %p211 = scmp.lt.s32.totalorder %s210, 15
          %s212 = scalar_select %p211, %s210, 15
          %s213 = smul.addr %s212, 8
          %s214 = scalar_lea.vmem %s4, %s213
          %s215 = smul.u32 16, %s26
        $region24: #{feed_forward.1} parent=11 // pred_fallthru
          _
        // Predicated region
        $region25: #{feed_forward.1} parent=11 // pred_check
          %p216 = pneg %p153
        $region26: #{feed_forward.1} parent=11 // pred_check_branch
          %218 = sbr.rel (%p216) target = $region28
        $region27: #{feed_forward.1} parent=11 // pred_region
          _
        $region28: #{feed_forward.1} parent=11 // pred_fallthru
          _
      $region12: #{feed_forward.1} parent=5 // pred_fallthru
        _
      %p219 = scmp.lt.s32.totalorder %s16, 2
      // Predicated region
      $region29: #{feed_forward.1} parent=5 // pred_check
        %p220 = pneg %p219
      $region30: #{feed_forward.1} parent=5 // pred_check_branch
        %222 = sbr.rel (%p220) target = $region32
      $region31: #{feed_forward.1} parent=5 // pred_region
        // Predicated region
        $region33: #{feed_forward.1} parent=31 // pred_check
          %p223 = pneg %p48
        $region34: #{feed_forward.1} parent=31 // pred_check_branch
          %225 = sbr.rel (%p223) target = $region36
        $region35: #{feed_forward.1} parent=31 // pred_region
          %p226 = scmp.lt.s32.totalorder %s23, 1
          %s227 = scalar_select %p226, %s23, 1
          %s228 = smul.addr %s227, 8
          %s229 = scalar_lea.vmem %s1, %s228
        $region36: #{feed_forward.1} parent=31 // pred_fallthru
          _
      $region32: #{feed_forward.1} parent=5 // pred_fallthru
        _
      %p230 = scmp.le.s32.totalorder 1, %s16
      %p231 = scmp.lt.s32.totalorder %s16, 3
      %p232 = pnand %p230, %p231
      %p233 = pneg %p232
      // Predicated region
      $region37: #{feed_forward.1} parent=5 // pred_check
        _
      $region38: #{feed_forward.1} parent=5 // pred_check_branch
        %235 = sbr.rel (%p232) target = $region40
      $region39: #{feed_forward.1} parent=5 // pred_region
        %s236 = ssub.s32 %s16, 1
        %p237 = scmp.lt.s32.totalorder %s25, 1
        %s238 = scalar_select %p237, %s25, 1
        %s239 = smul.addr %s238, 8
        %s240 = scalar_lea.vmem %s1, %s239
        %p241 = pneg %p54
        %p242 = pneg %p51
        %p243 = scmp.lt.s32.totalorder %s26, 0
        %s244 = scalar_select %p243, %s26, 0
        %s245 = smul.addr %s244, 8
        %s246 = scalar_lea.vmem %s2, %s245
        %p247 = pneg %p80
        %p248 = pneg %p77
        %p249 = scmp.lt.s32.totalorder %s26, 0
        %s250 = scalar_select %p249, %s26, 0
        %s251 = scalar_lea.vmem %s3, %s250
        %p252 = pneg %p106
        %p253 = pneg %p103
        %s254 = smul.u32 16, %s26
        %p255 = scmp.lt.s32.totalorder %s254, 15
        %s256 = scalar_select %p255, %s254, 15
        %s257 = smul.addr %s256, 8
        %s258 = scalar_lea.vmem %s4, %s257
        %p259 = pneg %p132
        %p260 = pneg %p129
        %p261 = pneg %p153
        %p262 = pneg %p150
        %p263 = pneg %p179
        %p264 = pneg %p176
        %s265 = sand.u32 %s166, 1
        %s266 = scalar_lea.sflag [#allocation5], %s265
        %s267 = sand.u32 %s166, 1
        %s268 = smul.addr %s267, 8
        %s269 = scalar_lea.vmem [#allocation4], %s268
        %p270 = scmp.lt.s32.totalorder %s25, 1
        %s271 = scalar_select %p270, %s25, 1
        %s272 = smul.addr %s271, 8
        %s273 = scalar_lea.vmem %s1, %s272
        %p274 = scmp.lt.s32.totalorder %s26, 0
        %s275 = scalar_select %p274, %s26, 0
        %s276 = smul.addr %s275, 8
        %s277 = scalar_lea.vmem %s2, %s276
        %p278 = scmp.lt.s32.totalorder %s26, 0
        %s279 = scalar_select %p278, %s26, 0
        %s280 = scalar_lea.vmem %s3, %s279
        %s281 = smul.u32 16, %s26
        %p282 = scmp.lt.s32.totalorder %s281, 15
        %s283 = scalar_select %p282, %s281, 15
        %s284 = smul.addr %s283, 8
        %s285 = scalar_lea.vmem %s4, %s284
        %s286 = smul.u32 16, %s26
        %p287 = scmp.eq.s32.totalorder %s26, 0
        // Predicated region
        $region41: #{feed_forward.1} parent=39 // pred_check
          %p288 = pneg %p287
        $region42: #{feed_forward.1} parent=39 // pred_check_branch
          %290 = sbr.rel (%p288) target = $region44
        $region43: #{feed_forward.1} parent=39 // pred_region
          %vm291 = vcmask 261120
          %292 = vst.msk [vmem:[%s269] sm:$0xff] %vm291, 0.0
        $region44: #{feed_forward.1} parent=39 // pred_fallthru
          _
        %v293 = vld [vmem:[%s273] sm:$0xff]
        %v294 = vld [vmem:[%s277] sm:$0xff]
        %v295 = vld [vmem:[%s277 + $0x8] sm:$0xff]
        %v296 = vld [vmem:[%s277 + $0x10] sm:$0xff]
        %v297 = vld [vmem:[%s277 + $0x18] sm:$0xff]
        %v298 = vld [vmem:[%s280] sm:$0x1]
        %v300 = vlaneseq
        %v301 = vshrl.u32 %v300, 7
        %v302 = vsub.s32 0, %v301
        %v303 = vrot.slane %v298, %v302
        %vm305 = vcmask 261120
        %v307 = vsel %vm305, %v293, 0
        %309 = vmatprep.subr.mxu0 0.0
        %310 = vmatpush1.msra.mxu0 %v294
        %311 = vmatprep.subr.mxu0 0.0
        %312 = vmatpush1.msra.mxu0 %v295
        %313 = vmatprep.subr.mxu0 0.0
        %314 = vmatpush1.msra.mxu0 %v296
        %315 = vmatprep.subr.mxu0 0.0
        %316 = vmatpush1.msra.mxu0 %v297
        %317 = vmatprep.subr.mxu0 0.0
        %318 = vmatpush1.msra.mxu0 0.0
        %319 = vmatprep.subr.mxu0 0.0
        %320 = vmatpush1.msra.mxu0 0.0
        %321 = vmatprep.subr.mxu0 0.0
        %322 = vmatpush1.msra.mxu0 0.0
        %323 = vmatprep.subr.mxu0 0.0
        %324 = vmatpush1.msra.mxu0 0.0
        %325 = vmatprep.subr.mxu0 0.0
        %326 = vmatpush1.msra.mxu0 0.0
        %327 = vmatprep.subr.mxu0 0.0
        %328 = vmatpush1.msra.mxu0 0.0
        %329 = vmatprep.subr.mxu0 0.0
        %330 = vmatpush1.msra.mxu0 0.0
        %331 = vmatprep.subr.mxu0 0.0
        %332 = vmatpush1.msra.mxu0 0.0
        %333 = vmatprep.subr.mxu0 0.0
        %334 = vmatpush1.msra.mxu0 0.0
        %335 = vmatprep.subr.mxu0 0.0
        %336 = vmatpush1.msra.mxu0 0.0
        %337 = vmatprep.subr.mxu0 0.0
        %338 = vmatpush1.msra.mxu0 0.0
        %339 = vmatprep.subr.mxu0 0.0
        %340 = vmatpush1.msra.mxu0 0.0
        %341 = vmatprep.subr.mxu0 0.0
        %342 = vmatpush1.msra.mxu0 0.0
        %343 = vmatprep.subr.mxu0 0.0
        %344 = vmatpush1.msra.mxu0 0.0
        %345 = vmatprep.subr.mxu0 0.0
        %346 = vmatpush1.msra.mxu0 0.0
        %347 = vmatprep.subr.mxu0 0.0
        %348 = vmatpush1.msra.mxu0 0.0
        %349 = vmatprep.subr.mxu0 0.0
        %350 = vmatpush1.msra.mxu0 0.0
        %351 = vmatprep.subr.mxu0 0.0
        %352 = vmatpush1.msra.mxu0 0.0
        %353 = vmatprep.subr.mxu0 0.0
        %354 = vmatpush1.msra.mxu0 0.0
        %355 = vmatprep.subr.mxu0 0.0
        %356 = vmatpush1.msra.mxu0 0.0
        %357 = vmatprep.subr.mxu0 0.0
        %358 = vmatpush1.msra.mxu0 0.0
        %359 = vmatprep.subr.mxu0 0.0
        %360 = vmatpush1.msra.mxu0 0.0
        %361 = vmatprep.subr.mxu0 0.0
        %362 = vmatpush1.msra.mxu0 0.0
        %363 = vmatprep.subr.mxu0 0.0
        %364 = vmatpush1.msra.mxu0 0.0
        %365 = vmatprep.subr.mxu0 0.0
        %366 = vmatpush1.msra.mxu0 0.0
        %367 = vmatprep.subr.mxu0 0.0
        %368 = vmatpush1.msra.mxu0 0.0
        %369 = vmatprep.subr.mxu0 0.0
        %370 = vmatpush1.msra.mxu0 0.0
        %371 = vmatprep.subr.mxu0 0.0
        %372 = vmatpush1.msra.mxu0 0.0
        %373 = vmatprep.mubr.f32.mxu0 0.0
        %374 = vmatmul.mubr.f32.gmra.mrb[0].mxu0 %v307
        %v375 = vpop.f32.mrb[0].mxu0
        %v376 = vadd.f32 %v303, %v375
        %v377 = vpop.f32.mrb[0].mxu0
        %378 = vdwg.mxu0
        %v379 = vmax.f32 %v376, 0.0
        %v380 = vld [vmem:[%s269] sm:$0xff]
        %v381 = vld [vmem:[%s285] sm:$0xff]
        %v382 = vld [vmem:[%s285 + $0x8] sm:$0xff]
        %v383 = vld [vmem:[%s285 + $0x10] sm:$0xff]
        %v384 = vld [vmem:[%s285 + $0x18] sm:$0xff]
        %v385 = vld [vmem:[%s285 + $0x20] sm:$0xff]
        %v386 = vld [vmem:[%s285 + $0x28] sm:$0xff]
        %v387 = vld [vmem:[%s285 + $0x30] sm:$0xff]
        %v388 = vld [vmem:[%s285 + $0x38] sm:$0xff]
        %v389 = vld [vmem:[%s285 + $0x40] sm:$0xff]
        %v390 = vld [vmem:[%s285 + $0x48] sm:$0xff]
        %v391 = vld [vmem:[%s285 + $0x50] sm:$0xff]
        %v392 = vld [vmem:[%s285 + $0x58] sm:$0xff]
        %v393 = vld [vmem:[%s285 + $0x60] sm:$0xff]
        %v394 = vld [vmem:[%s285 + $0x68] sm:$0xff]
        %v395 = vld [vmem:[%s285 + $0x70] sm:$0xff]
        %v396 = vld [vmem:[%s285 + $0x78] sm:$0xff]
        %397 = vmatprep.subr.mxu0 0.0
        %398 = vmatpush1.msra.mxu0 %v381
        %399 = vmatprep.subr.mxu0 0.0
        %400 = vmatpush1.msra.mxu0 %v382
        %401 = vmatprep.subr.mxu0 0.0
        %402 = vmatpush1.msra.mxu0 %v383
        %403 = vmatprep.subr.mxu0 0.0
        %404 = vmatpush1.msra.mxu0 %v384
        %405 = vmatprep.subr.mxu0 0.0
        %406 = vmatpush1.msra.mxu0 %v385
        %407 = vmatprep.subr.mxu0 0.0
        %408 = vmatpush1.msra.mxu0 %v386
        %409 = vmatprep.subr.mxu0 0.0
        %410 = vmatpush1.msra.mxu0 %v387
        %411 = vmatprep.subr.mxu0 0.0
        %412 = vmatpush1.msra.mxu0 %v388
        %413 = vmatprep.subr.mxu0 0.0
        %414 = vmatpush1.msra.mxu0 %v389
        %415 = vmatprep.subr.mxu0 0.0
        %416 = vmatpush1.msra.mxu0 %v390
        %417 = vmatprep.subr.mxu0 0.0
        %418 = vmatpush1.msra.mxu0 %v391
        %419 = vmatprep.subr.mxu0 0.0
        %420 = vmatpush1.msra.mxu0 %v392
        %421 = vmatprep.subr.mxu0 0.0
        %422 = vmatpush1.msra.mxu0 %v393
        %423 = vmatprep.subr.mxu0 0.0
        %424 = vmatpush1.msra.mxu0 %v394
        %425 = vmatprep.subr.mxu0 0.0
        %426 = vmatpush1.msra.mxu0 %v395
        %427 = vmatprep.subr.mxu0 0.0
        %428 = vmatpush1.msra.mxu0 %v396
        %429 = vmatprep.subr.mxu0 0.0
        %430 = vmatpush1.msra.mxu0 0.0
        %431 = vmatprep.subr.mxu0 0.0
        %432 = vmatpush1.msra.mxu0 0.0
        %433 = vmatprep.subr.mxu0 0.0
        %434 = vmatpush1.msra.mxu0 0.0
        %435 = vmatprep.subr.mxu0 0.0
        %436 = vmatpush1.msra.mxu0 0.0
        %437 = vmatprep.subr.mxu0 0.0
        %438 = vmatpush1.msra.mxu0 0.0
        %439 = vmatprep.subr.mxu0 0.0
        %440 = vmatpush1.msra.mxu0 0.0
        %441 = vmatprep.subr.mxu0 0.0
        %442 = vmatpush1.msra.mxu0 0.0
        %443 = vmatprep.subr.mxu0 0.0
        %444 = vmatpush1.msra.mxu0 0.0
        %445 = vmatprep.subr.mxu0 0.0
        %446 = vmatpush1.msra.mxu0 0.0
        %447 = vmatprep.subr.mxu0 0.0
        %448 = vmatpush1.msra.mxu0 0.0
        %449 = vmatprep.subr.mxu0 0.0
        %450 = vmatpush1.msra.mxu0 0.0
        %451 = vmatprep.subr.mxu0 0.0
        %452 = vmatpush1.msra.mxu0 0.0
        %453 = vmatprep.subr.mxu0 0.0
        %454 = vmatpush1.msra.mxu0 0.0
        %455 = vmatprep.subr.mxu0 0.0
        %456 = vmatpush1.msra.mxu0 0.0
        %457 = vmatprep.subr.mxu0 0.0
        %458 = vmatpush1.msra.mxu0 0.0
        %459 = vmatprep.subr.mxu0 0.0
        %460 = vmatpush1.msra.mxu0 0.0
        %461 = vmatprep.mubr.f32.mxu0 0.0
        %462 = vmatmul.mubr.f32.gmra.mrb[0].mxu0 %v379
        %v463 = vpop.f32.mrb[0].mxu0
        %v464 = vadd.f32 0.0, %v463
        %v465 = vpop.f32.mrb[0].mxu0
        %466 = vdwg.mxu0
        %v467 = vadd.f32 %v380, %v464
        %468 = vst.msk [vmem:[%s269] sm:$0xff] %vm305, %v467
        // Predicated region
        $region45: #{feed_forward.1} parent=39 // pred_check
          %p469 = pneg %p287
        $region46: #{feed_forward.1} parent=39 // pred_check_branch
          %471 = sbr.rel (%p469) target = $region48
        $region47: #{feed_forward.1} parent=39 // pred_region
          %v472 = vld [vmem:[%s269] sm:$0xff]
          %v473 = vld [vmem:[%s5] sm:$0x1]
          %v475 = vlaneseq
          %v476 = vshrl.u32 %v475, 7
          %v477 = vsub.s32 0, %v476
          %v478 = vrot.slane %v473, %v477
          %v480 = vadd.f32 %v472, %v478
          %481 = vst.msk [vmem:[%s269] sm:$0xff] %vm305, %v480
        $region48: #{feed_forward.1} parent=39 // pred_fallthru
          _
        %s482 = sand.u32 %s166, 1
        %s483 = scalar_lea.sflag [#allocation5], %s482
        %s484 = sand.u32 %s166, 1
        %s485 = smul.addr %s484, 8
        %s486 = scalar_lea.vmem [#allocation4], %s485
        // Predicated region
        $region49: #{feed_forward.1} parent=39 // pred_check
          %p487 = pneg %p176
        $region50: #{feed_forward.1} parent=39 // pred_check_branch
          %489 = sbr.rel (%p487) target = $region52
        $region51: #{feed_forward.1} parent=39 // pred_region
          %s491 = ssub.s32 128, 128
          %492 = vsyncadd %s483, %s491
          %s493 = smul.addr %s25, 128
          %s494 = scalar_lea.hbm %s6, %s493
          %s496 = sshll.u32 %s486, 4
          %s497 = int_to_ptr.vmem [resolvable:$true] %s496
          %499 = dma.vmem_to_hbm [thread:$0]  %s497, 128, %s494, %s483
        $region52: #{feed_forward.1} parent=39 // pred_fallthru
          _
      $region40: #{feed_forward.1} parent=5 // pred_fallthru
        _
      %p500 = scmp.le.s32.totalorder 2, %s16
      // Predicated region
      $region53: #{feed_forward.1} parent=5 // pred_check
        %p501 = pneg %p500
      $region54: #{feed_forward.1} parent=5 // pred_check_branch
        %503 = sbr.rel (%p501) target = $region56
      $region55: #{feed_forward.1} parent=5 // pred_region
        %s504 = ssub.s32 %s16, 2
        // Predicated region
        $region57: #{feed_forward.1} parent=55 // pred_check
          %p505 = pneg %p182
        $region58: #{feed_forward.1} parent=55 // pred_check_branch
          %507 = sbr.rel (%p505) target = $region60
        $region59: #{feed_forward.1} parent=55 // pred_region
          %s508 = sand.u32 %s167, 1
          %s509 = scalar_lea.sflag [#allocation5], %s508
          %s510 = sand.u32 %s167, 1
          %s511 = smul.addr %s510, 8
          %s512 = scalar_lea.vmem [#allocation4], %s511
          %513 = dma.done %s509, 128
        $region60: #{feed_forward.1} parent=55 // pred_fallthru
          _
      $region56: #{feed_forward.1} parent=5 // pred_fallthru
        _
    $region6: #{feed_forward.1} parent=1 // loop_footer
      %s20 = sadd.s32 1, %s16
    $region7: #{feed_forward.1} parent=1 // loop_footer_branch
      %15 = sbr.rel target = $region3
    $region8: #{feed_forward.1} parent=1 // loop_exit
      _
    %514 = vsyncpa [#allocation5], 1
    %s515 = scalar_lea.sflag [#allocation5], 1
    %516 = vsyncpa %s515, 1

</llo_original>
